<compile_context>
chip_gen: v6e
topology: v6e:2x2x1
jax: 0.10.0
libtpu: 0.0.40
codegen_flags: <defaults>
</compile_context>

<pallas_src>
import functools

import jax
import jax.numpy as jnp
from jax.experimental import pallas as pl
from jax.experimental.pallas import tpu as pltpu


def _round_up(x, m):
    return ((x + m - 1) // m) * m


def _vmem_budget():
    """(tile-sizing budget, vmem_limit_bytes) — generation aware."""
    cap = None
    try:
        cap = getattr(pltpu.get_tpu_info(), "vmem_capacity_bytes", None)
    except Exception:
        cap = None
    if cap is not None and cap >= 100 * 1024 * 1024:
        # v5e / v6e: 128 MiB VMEM -> allow big row tiles.
        return 48 * 1024 * 1024, 64 * 1024 * 1024
    # v7x (64 MiB physical / 32 MiB scoped) or unknown: stay conservative.
    return 20 * 1024 * 1024, 32 * 1024 * 1024


def _pick_tile(n, d_in, d_out, requested, budget):
    """Largest row tile (multiple of 8) whose working set fits the budget,
    capped so the parallel row grid has >= 2 steps (v7x has 2 TensorCores)."""
    assert requested >= 8 and requested % 8 == 0, "tile_n must be a positive multiple of 8"
    tile = _round_up(max(1, min(requested, n)), 8)
    if n > 8:
        tile = min(tile, _round_up(pl.cdiv(n, 2), 8))
    # Resident params (weight + per-feature vectors), double-buffered, <=4 B/elem.
    fixed = 8 * (d_in * d_out + 6 * d_out)
    # Per-row activation bytes: h + x + out tiles, double-buffered, <=4 B/elem.
    per_row = 8 * (d_in + 2 * d_out)
    # TODO(synk): if `fixed` alone exceeds the budget (huge d_in*d_out), add a
    # K-tiling reduction grid axis with an f32 VMEM accumulator instead of
    # shrinking the row tile to 8.
    while tile > 8 and fixed + tile * per_row > budget:
        tile = _round_up(tile // 2, 8)
    return max(tile, 8)


def _sketch_output_kernel(seed_ref, h_ref, x_ref, w_ref, b_ref, g_ref, bt_ref,
                          *rest, norm_type, eps, dropout_prob, training,
                          tile_rows, d_valid):
    # seed_ref : SMEM [1] int32 (scalar prefetch; only used for dropout)
    # h_ref    : [TN, D_in]       hidden_states tile (caller dtype)
    # x_ref    : [TN, D_pad]      residual tile       (caller dtype)
    # w_ref    : [D_pad, D_in]    fc weight, resident (no transpose copy)
    # b_ref    : [1, D_pad]       fc bias
    # g_ref    : [1, D_pad]       norm weight (gamma)
    # bt_ref   : [1, D_pad]       norm bias  (beta)
    # rest     : (o_ref,) for LN, (running_mean, running_var, o_ref) for BN
    if norm_type == "LN":
        (o_ref,) = rest
    else:
        rm_ref, rv_ref, o_ref = rest

    # fc: one fused MXU matmul per row tile, contracting the last dim of both
    # operands (weight stays [D_out, D_in] -> no HBM transpose), f32 accumulate.
    y = jax.lax.dot_general(
        h_ref[...], w_ref[...],
        dimension_numbers=(((1,), (1,)), ((), ())),
        preferred_element_type=jnp.float32)
    y = y + b_ref[...].astype(jnp.float32)

    if training and dropout_prob > 0.0:
        # Stateless counter-based inverted dropout: hash(global element id, seed)
        # compared directly against a uint32 threshold (no float convert).
        thresh = jnp.uint32(min(int(round(dropout_prob * 4294967296.0)), 4294967295))
        row = jax.lax.broadcasted_iota(jnp.int32, y.shape, 0)
        col = jax.lax.broadcasted_iota(jnp.int32, y.shape, 1)
        gid = (pl.program_id(0) * tile_rows + row) * y.shape[1] + col
        bits = gid.astype(jnp.uint32) + seed_ref[0].astype(jnp.uint32) * jnp.uint32(0x9E3779B9)
        bits = (bits ^ (bits >> 16)) * jnp.uint32(0x7FEB352D)
        bits = (bits ^ (bits >> 15)) * jnp.uint32(0x846CA68B)
        bits = bits ^ (bits >> 16)
        keep = bits >= thresh
        y = jnp.where(keep, y * jnp.float32(1.0 / (1.0 - dropout_prob)), 0.0)

    # residual add (f32)
    y = y + x_ref[...].astype(jnp.float32)

    if norm_type == "LN":
        d_pad = y.shape[-1]
        if d_valid == d_pad:
            mean = jnp.mean(y, axis=-1, keepdims=True)
            c = y - mean
            var = jnp.mean(c * c, axis=-1, keepdims=True)
        else:
            # Feature dim was padded to a multiple of 128 for lane-dense stores;
            # padded columns are exactly 0 pre-norm, so only the variance needs
            # an explicit column mask.
            inv_d = jnp.float32(1.0 / d_valid)
            mean = jnp.sum(y, axis=-1, keepdims=True) * inv_d
            c = y - mean
            col = jax.lax.broadcasted_iota(jnp.int32, y.shape, 1)
            cv = jnp.where(col < d_valid, c, 0.0)
            var = jnp.sum(cv * cv, axis=-1, keepdims=True) * inv_d
        y = c * jax.lax.rsqrt(var + eps)
    else:
        # BN1d / BN2d inference-mode affine from running stats.
        # TODO(synk): training-mode BatchNorm needs batch statistics across the
        # whole grid (cross-tile reduction + running-stat update); eval only.
        y = (y - rm_ref[...].astype(jnp.float32)) * jax.lax.rsqrt(
            rv_ref[...].astype(jnp.float32) + eps)

    o_ref[...] = (y * g_ref[...].astype(jnp.float32)
                  + bt_ref[...].astype(jnp.float32)).astype(o_ref.dtype)


def sketch_output_forward(hidden_states, input_states, fc_weight, fc_bias,
                          norm_weight, norm_bias, *, norm_type="LN", eps=1e-5,
                          dropout_prob=0.0, training=False, dropout_seed=0,
                          running_mean=None, running_var=None, tile_n=512):
    assert norm_type in ("LN", "BN1d", "BN2d")
    lead_shape = hidden_states.shape[:-1]
    d_in = hidden_states.shape[-1]
    d_out = fc_weight.shape[0]
    assert fc_weight.shape == (d_out, d_in)
    assert input_states.shape == lead_shape + (d_out,)

    out_dtype = jnp.result_type(hidden_states.dtype, input_states.dtype)

    n = 1
    for s in lead_shape:
        n *= s

    # Activations stay in the caller's dtype (no wrapper-side f32 upcast copy,
    # no row padding); math is f32 inside the kernel.
    h2 = hidden_states.reshape(n, d_in)
    x2 = input_states.reshape(n, d_out)

    # Lane-dense insurance: pad the feature axis to a multiple of 128 so output
    # stores stay unmasked vst (no-op for the common d_out % 128 == 0 case).
    d_pad = _round_up(d_out, 128)
    fpad = d_pad - d_out

    w = fc_weight                                   # [d_out, d_in]; never transposed
    b = fc_bias.reshape(1, d_out)
    g = norm_weight.reshape(1, d_out)
    bt = norm_bias.reshape(1, d_out)
    if fpad:
        w = jnp.pad(w, ((0, fpad), (0, 0)))
        b = jnp.pad(b, ((0, 0), (0, fpad)))
        g = jnp.pad(g, ((0, 0), (0, fpad)))
        bt = jnp.pad(bt, ((0, 0), (0, fpad)))
        x2 = jnp.pad(x2, ((0, 0), (0, fpad)))

    budget, vmem_limit = _vmem_budget()
    tile = _pick_tile(n, d_in, d_pad, tile_n, budget)
    grid = pl.cdiv(n, tile)                          # ragged last block is masked

    def const2d(shape):
        return pl.BlockSpec(shape, lambda i, seed: (0, 0))

    inputs = [h2, x2, w, b, g, bt]
    in_specs = [
        pl.BlockSpec((tile, d_in), lambda i, seed: (i, 0)),
        pl.BlockSpec((tile, d_pad), lambda i, seed: (i, 0)),
        const2d((d_pad, d_in)),
        const2d((1, d_pad)),
        const2d((1, d_pad)),
        const2d((1, d_pad)),
    ]
    if norm_type != "LN":
        assert running_mean is not None and running_var is not None
        rm = running_mean.reshape(1, d_out)
        rv = running_var.reshape(1, d_out)
        if fpad:
            rm = jnp.pad(rm, ((0, 0), (0, fpad)))
            rv = jnp.pad(rv, ((0, 0), (0, fpad)))
        inputs += [rm, rv]
        in_specs += [const2d((1, d_pad)), const2d((1, d_pad))]

    kernel = functools.partial(
        _sketch_output_kernel, norm_type=norm_type, eps=float(eps),
        dropout_prob=float(dropout_prob), training=bool(training),
        tile_rows=tile, d_valid=d_out)

    seed = jnp.asarray([dropout_seed], dtype=jnp.int32)

    out = pl.pallas_call(
        kernel,
        out_shape=jax.ShapeDtypeStruct((n, d_pad), out_dtype),
        grid_spec=pltpu.PrefetchScalarGridSpec(
            num_scalar_prefetch=1,
            grid=(grid,),
            in_specs=in_specs,
            out_specs=pl.BlockSpec((tile, d_pad), lambda i, seed: (i, 0)),
        ),
        compiler_params=pltpu.CompilerParams(
            dimension_semantics=("parallel",),       # rows are independent
            vmem_limit_bytes=vmem_limit),
    )(seed, *inputs)

    if fpad:
        out = out[:, :d_out]
    return out.reshape(*lead_shape, d_out)


def _reference(hidden, inp, fc_w, fc_b, g, beta, norm_type, eps,
               running_mean=None, running_var=None):
    y = jnp.einsum("...i,oi->...o", hidden, fc_w) + fc_b
    y = y + inp                                   # dropout is identity in eval
    if norm_type == "LN":
        m = jnp.mean(y, axis=-1, keepdims=True)
        v = jnp.mean((y - m) ** 2, axis=-1, keepdims=True)
        y = (y - m) / jnp.sqrt(v + eps)
    else:
        y = (y - running_mean) / jnp.sqrt(running_var + eps)
    return y * g + beta


if __name__ == "__main__":
    # Align XLA-reference and in-kernel matmul precision (both f32-accurate).
    jax.config.update("jax_default_matmul_precision", "highest")

    input_dim, output_dim = 64, 128
    batch, seq_len = 2, 8
    eps = 1e-5

    key = jax.random.PRNGKey(0)
    k_h, k_x, k_w, k_b, k_g, k_bt, k_rm, k_rv, k_x3, k_w3 = jax.random.split(key, 10)

    hidden_states = jax.random.normal(k_h, (batch, seq_len, input_dim), jnp.float32)
    input_states = jax.random.normal(k_x, (batch, seq_len, output_dim), jnp.float32)

    fc_weight = 0.1 * jax.random.normal(k_w, (output_dim, input_dim), jnp.float32)
    fc_bias = 0.1 * jax.random.normal(k_b, (output_dim,), jnp.float32)
    norm_weight = 1.0 + 0.1 * jax.random.normal(k_g, (output_dim,), jnp.float32)
    norm_bias = 0.1 * jax.random.normal(k_bt, (output_dim,), jnp.float32)
    running_mean = 0.1 * jax.random.normal(k_rm, (output_dim,), jnp.float32)
    running_var = 0.5 + jax.nn.softplus(jax.random.normal(k_rv, (output_dim,), jnp.float32))

    # 1) LayerNorm variant, eval mode (dropout is identity) — exact check.
    out_ln = sketch_output_forward(hidden_states, input_states, fc_weight, fc_bias,
                                   norm_weight, norm_bias, norm_type="LN", eps=eps,
                                   dropout_prob=0.1, training=False)
    out_ln = jax.block_until_ready(out_ln)
    ref_ln = _reference(hidden_states, input_states, fc_weight, fc_bias,
                        norm_weight, norm_bias, "LN", eps)
    assert out_ln.shape == (batch, seq_len, output_dim), out_ln.shape
    assert jnp.allclose(out_ln, ref_ln, atol=1e-3, rtol=1e-3), "LN mismatch"

    # 2) BatchNorm variant (inference-mode affine with running stats).
    out_bn = sketch_output_forward(hidden_states, input_states, fc_weight, fc_bias,
                                   norm_weight, norm_bias, norm_type="BN1d", eps=eps,
                                   running_mean=running_mean, running_var=running_var)
    out_bn = jax.block_until_ready(out_bn)
    ref_bn = _reference(hidden_states, input_states, fc_weight, fc_bias,
                        norm_weight, norm_bias, "BN1d", eps,
                        running_mean=running_mean, running_var=running_var)
    assert out_bn.shape == (batch, seq_len, output_dim), out_bn.shape
    assert jnp.allclose(out_bn, ref_bn, atol=1e-3, rtol=1e-3), "BN1d mismatch"

    # 3) Non-multiple-of-128 output dim (exercises the lane-dense padding path).
    d_out3 = 96
    input_states3 = jax.random.normal(k_x3, (batch, seq_len, d_out3), jnp.float32)
    fc_weight3 = 0.1 * jax.random.normal(k_w3, (d_out3, input_dim), jnp.float32)
    fc_bias3 = fc_bias[:d_out3]
    norm_weight3 = norm_weight[:d_out3]
    norm_bias3 = norm_bias[:d_out3]
    out_96 = sketch_output_forward(hidden_states, input_states3, fc_weight3, fc_bias3,
                                   norm_weight3, norm_bias3, norm_type="LN", eps=eps)
    out_96 = jax.block_until_ready(out_96)
    ref_96 = _reference(hidden_states, input_states3, fc_weight3, fc_bias3,
                        norm_weight3, norm_bias3, "LN", eps)
    assert out_96.shape == (batch, seq_len, d_out3), out_96.shape
    assert jnp.allclose(out_96, ref_96, atol=1e-3, rtol=1e-3), "LN d_out=96 mismatch"

    # 4) Training-mode dropout path (stochastic): runs, finite, and actually drops.
    out_do = sketch_output_forward(hidden_states, input_states, fc_weight, fc_bias,
                                   norm_weight, norm_bias, norm_type="LN", eps=eps,
                                   dropout_prob=0.5, training=True, dropout_seed=123)
    out_do = jax.block_until_ready(out_do)
    assert out_do.shape == (batch, seq_len, output_dim), out_do.shape
    assert bool(jnp.all(jnp.isfinite(out_do))), "non-finite dropout output"
    assert not bool(jnp.allclose(out_do, out_ln, atol=1e-3)), "dropout had no effect"

    print("KERNEL_OK")
</pallas_src>

<mosaic_0001>
module attributes {stable_mosaic.version = 11 : i64} {
  func.func @_sketch_output_kernel(%arg0: i32, %arg1: memref<1xi32, #tpu.memory_space<smem>>, %arg2: memref<8x64xf32, #tpu.memory_space<vmem>>, %arg3: memref<8x128xf32, #tpu.memory_space<vmem>>, %arg4: memref<128x64xf32, #tpu.memory_space<vmem>>, %arg5: memref<1x128xf32, #tpu.memory_space<vmem>>, %arg6: memref<1x128xf32, #tpu.memory_space<vmem>>, %arg7: memref<1x128xf32, #tpu.memory_space<vmem>>, %arg8: memref<8x128xf32, #tpu.memory_space<vmem>>) attributes {dimension_semantics = [#tpu.dimension_semantics<parallel>], iteration_bounds = array<i64: 2>, scalar_prefetch = 1 : i64, scratch_operands = 0 : i64, tpu.core_type = #tpu.core_type<tc>, window_params = [{transform_indices = @transform_0, window_bounds = array<i64: 8, 64>}, {transform_indices = @transform_1, window_bounds = array<i64: 8, 128>}, {pipeline_mode = #tpu.pipeline_mode<synchronous>, transform_indices = @transform_2, window_bounds = array<i64: 128, 64>}, {pipeline_mode = #tpu.pipeline_mode<synchronous>, transform_indices = @transform_3, window_bounds = array<i64: 1, 128>}, {pipeline_mode = #tpu.pipeline_mode<synchronous>, transform_indices = @transform_4, window_bounds = array<i64: 1, 128>}, {pipeline_mode = #tpu.pipeline_mode<synchronous>, transform_indices = @transform_5, window_bounds = array<i64: 1, 128>}, {transform_indices = @transform_6, window_bounds = array<i64: 8, 128>}]} {
    %c0 = arith.constant 0 : index
    %c0_0 = arith.constant 0 : index
    %0 = vector.load %arg2[%c0, %c0_0] : memref<8x64xf32, #tpu.memory_space<vmem>>, vector<8x64xf32>
    %c0_1 = arith.constant 0 : index
    %c0_2 = arith.constant 0 : index
    %1 = vector.load %arg4[%c0_1, %c0_2] : memref<128x64xf32, #tpu.memory_space<vmem>>, vector<128x64xf32>
    %cst = arith.constant dense<0.000000e+00> : vector<8x128xf32>
    %2 = tpu.matmul %0, %1, %cst {dimension_numbers = #tpu.dot_dimension_numbers<[1], [1], [0], [0], [0, 0, 1, 0], [], []>, precision = #tpu.contract_precision<fp32>} : vector<8x64xf32>, vector<128x64xf32>, vector<8x128xf32> -> vector<8x128xf32>
    %c0_3 = arith.constant 0 : index
    %c0_4 = arith.constant 0 : index
    %3 = vector.load %arg5[%c0_3, %c0_4] : memref<1x128xf32, #tpu.memory_space<vmem>>, vector<1x128xf32>
    %4 = vector.broadcast %3 : vector<1x128xf32> to vector<8x128xf32>
    %5 = arith.addf %2, %4 : vector<8x128xf32>
    %c0_5 = arith.constant 0 : index
    %c0_6 = arith.constant 0 : index
    %6 = vector.load %arg3[%c0_5, %c0_6] : memref<8x128xf32, #tpu.memory_space<vmem>>, vector<8x128xf32>
    %7 = arith.addf %5, %6 : vector<8x128xf32>
    %cst_7 = arith.constant dense<0.000000e+00> : vector<8xf32>
    %8 = vector.multi_reduction <add>, %7, %cst_7 [1] : vector<8x128xf32> to vector<8xf32>
    %9 = vector.shape_cast %8 : vector<8xf32> to vector<8x1xf32>
    %cst_8 = arith.constant 1.280000e+02 : f32
    %10 = vector.broadcast %cst_8 : f32 to vector<8x1xf32>
    %11 = arith.divf %9, %10 : vector<8x1xf32>
    %12 = vector.broadcast %11 : vector<8x1xf32> to vector<8x128xf32>
    %13 = arith.subf %7, %12 : vector<8x128xf32>
    %14 = arith.mulf %13, %13 : vector<8x128xf32>
    %cst_9 = arith.constant dense<0.000000e+00> : vector<8xf32>
    %15 = vector.multi_reduction <add>, %14, %cst_9 [1] : vector<8x128xf32> to vector<8xf32>
    %16 = vector.shape_cast %15 : vector<8xf32> to vector<8x1xf32>
    %cst_10 = arith.constant 1.280000e+02 : f32
    %17 = vector.broadcast %cst_10 : f32 to vector<8x1xf32>
    %18 = arith.divf %16, %17 : vector<8x1xf32>
    %cst_11 = arith.constant 9.99999974E-6 : f32
    %19 = vector.broadcast %cst_11 : f32 to vector<8x1xf32>
    %20 = arith.addf %18, %19 : vector<8x1xf32>
    %21 = math.rsqrt %20 : vector<8x1xf32>
    %22 = vector.broadcast %21 : vector<8x1xf32> to vector<8x128xf32>
    %23 = arith.mulf %13, %22 : vector<8x128xf32>
    %c0_12 = arith.constant 0 : index
    %c0_13 = arith.constant 0 : index
    %24 = vector.load %arg6[%c0_12, %c0_13] : memref<1x128xf32, #tpu.memory_space<vmem>>, vector<1x128xf32>
    %25 = vector.broadcast %24 : vector<1x128xf32> to vector<8x128xf32>
    %26 = arith.mulf %23, %25 : vector<8x128xf32>
    %c0_14 = arith.constant 0 : index
    %c0_15 = arith.constant 0 : index
    %27 = vector.load %arg7[%c0_14, %c0_15] : memref<1x128xf32, #tpu.memory_space<vmem>>, vector<1x128xf32>
    %28 = vector.broadcast %27 : vector<1x128xf32> to vector<8x128xf32>
    %29 = arith.addf %26, %28 : vector<8x128xf32>
    %c0_16 = arith.constant 0 : index
    %c0_17 = arith.constant 0 : index
    %30 = vector.load %arg8[%c0_16, %c0_17] : memref<8x128xf32, #tpu.memory_space<vmem>>, vector<8x128xf32>
    tpu.vector_store %arg8[%c0_16, %c0_17], %29 {strides = array<i32>} : memref<8x128xf32, #tpu.memory_space<vmem>>, vector<8x128xf32>,
    return
  }
  func.func @transform_0(%arg0: i32, %arg1: memref<1xi32, #tpu.memory_space<smem>>) -> (i32, i32) {
    %c0_i32 = arith.constant 0 : i32
    %c0_i32_0 = arith.constant 0 : i32
    return %arg0, %c0_i32 : i32, i32
  }
  func.func @transform_1(%arg0: i32, %arg1: memref<1xi32, #tpu.memory_space<smem>>) -> (i32, i32) {
    %c0_i32 = arith.constant 0 : i32
    %c0_i32_0 = arith.constant 0 : i32
    return %arg0, %c0_i32 : i32, i32
  }
  func.func @transform_2(%arg0: i32, %arg1: memref<1xi32, #tpu.memory_space<smem>>) -> (i32, i32) {
    %c0_i32 = arith.constant 0 : i32
    %c0_i32_0 = arith.constant 0 : i32
    %c0_i32_1 = arith.constant 0 : i32
    return %c0_i32, %c0_i32_0 : i32, i32
  }
  func.func @transform_3(%arg0: i32, %arg1: memref<1xi32, #tpu.memory_space<smem>>) -> (i32, i32) {
    %c0_i32 = arith.constant 0 : i32
    %c0_i32_0 = arith.constant 0 : i32
    %c0_i32_1 = arith.constant 0 : i32
    return %c0_i32, %c0_i32_0 : i32, i32
  }
  func.func @transform_4(%arg0: i32, %arg1: memref<1xi32, #tpu.memory_space<smem>>) -> (i32, i32) {
    %c0_i32 = arith.constant 0 : i32
    %c0_i32_0 = arith.constant 0 : i32
    %c0_i32_1 = arith.constant 0 : i32
    return %c0_i32, %c0_i32_0 : i32, i32
  }
  func.func @transform_5(%arg0: i32, %arg1: memref<1xi32, #tpu.memory_space<smem>>) -> (i32, i32) {
    %c0_i32 = arith.constant 0 : i32
    %c0_i32_0 = arith.constant 0 : i32
    %c0_i32_1 = arith.constant 0 : i32
    return %c0_i32, %c0_i32_0 : i32, i32
  }
  func.func @transform_6(%arg0: i32, %arg1: memref<1xi32, #tpu.memory_space<smem>>) -> (i32, i32) {
    %c0_i32 = arith.constant 0 : i32
    %c0_i32_0 = arith.constant 0 : i32
    return %arg0, %c0_i32 : i32, i32
  }
}

</mosaic_0001>

<llo_original>
// kernel: tpu_custom_call.1
$region0: #{tpu_custom_call.1}
  #allocation0 [shape = 'u32[]', space=smem, size = 0x4, offset = 0x4, fixed_abs, tag = 'smem constant byte address 0x4 - core index']
  #allocation1 [shape = 'u32[144,128]{1,0:T(1,128)}', space=vmem, size = 0x12000, scoped, tag = 'internal scratch']
  #allocation2 [shape = 's32[1]{0}', space=sflag, size = 0x4, scoped, tag = 'scoped memory for tpu_custom_call.1']
  #allocation3 [shape = 's32[1]{0:T(128)S(6)}', space=smem, size = 0x200, scoped, tag = 'prefetched SMEM operand 0']
  %s0 = inlined_call_operand.<no memory space> [shape: s32[1], index: 0, kind: input, shape index: {}]
  %s1 = inlined_call_operand.vmem [shape: f32[16,64], index: 1, kind: input, shape index: {}]
  %s2 = inlined_call_operand.vmem [shape: f32[16,128], index: 2, kind: input, shape index: {}]
  %s3 = inlined_call_operand.vmem [shape: f32[128,64], index: 3, kind: input, shape index: {}]
  %s4 = inlined_call_operand.vmem [shape: f32[1,128], index: 4, kind: input, shape index: {}]
  %s5 = inlined_call_operand.vmem [shape: f32[1,128], index: 5, kind: input, shape index: {}]
  %s6 = inlined_call_operand.vmem [shape: f32[1,128], index: 6, kind: input, shape index: {}]
  %s7 = inlined_call_operand.hbm [shape: f32[16,128], index: 7, kind: output, shape index: {}]
  %s8 = sld [smem:[#allocation0]]
  $region57: #{tpu_custom_call.1} parent=0
    _
  %s10 = ssub.s32 1, %s8
  %s11 = scalar_select 0, %s10, %s8
  %12 = sst [smem:[#allocation3]] %s0
  $region1: #{tpu_custom_call.1} parent=0
    #allocation4 [shape = 'u8[8192]{0}', space=vmem, size = 0x2000, scoped, tag = 'output window, operand 0']
    #allocation5 [shape = 's32[2]{0}', space=sflag, size = 0x8, scoped, tag = 'scoped memory for tpu_custom_call.1']
    %13 = vsyncpa [#allocation5], 0
    %s14 = scalar_lea.sflag [#allocation5], 1
    %15 = vsyncpa %s14, 0
    loop: start=0, step=1, limit=4
    $region2: #{tpu_custom_call.1} parent=1 // loop_pre_header
      _
    $region3: #{tpu_custom_call.1} parent=1 // loop_header
      %s17 = sphi 0, %s21
      %p18 = scmp.ge.s32.totalorder %s17, 4
      %s27 = sphi 0, %s29
      %s30 = sphi 0, %s27
      %s31 = sphi 0, %s30
      %s47 = sphi 0, %s31
      %s53 = sphi 0, %s55
      %s56 = sphi 0, %s53
      %s57 = sphi 0, %s56
      %s73 = sphi 0, %s57
      %s77 = sphi 0, %s77
      %s79 = sphi 0, %s77
      %s80 = sphi 0, %s79
      %s94 = sphi 0, %s80
      %s98 = sphi 0, %s98
      %s100 = sphi 0, %s98
      %s101 = sphi 0, %s100
      %s115 = sphi 0, %s101
      %s119 = sphi 0, %s119
      %s121 = sphi 0, %s119
      %s122 = sphi 0, %s121
      %s136 = sphi 0, %s122
      %s140 = sphi 0, %s140
      %s142 = sphi 0, %s140
      %s143 = sphi 0, %s142
      %s157 = sphi 0, %s143
      %s163 = sphi 0, %s165
      %s166 = sphi 0, %s163
      %s167 = sphi 0, %s166
      %s183 = sphi 0, %s167
    $region4: #{tpu_custom_call.1} parent=1 // loop_header_branch
      %20 = sbr.rel (%p18) target = $region8
    $region5: #{tpu_custom_call.1} parent=1 // loop_body
      %s22 = ssub.s32 %s17, 1
      %s23 = ssub.s32 %s17, 2
      %s24 = sadd.s32 %s17, 1
      %s25 = ssub.s32 %s17, %s24
      %p26 = scmp.eq.s32.totalorder %s25, 0
      %s28 = sadd.s32 %s27, 1
      %s29 = scalar_select %p26, %s27, %s28
      %p32 = pneg %p26
      %p33 = scmp.eq.s32.totalorder %s17, 1
      %p34 = por %p32, %p33
      %p35 = scmp.ne.s32.totalorder %s27, %s30
      %p36 = scmp.eq.s32.totalorder %s17, 0
      %p37 = por %p35, %p36
      %p38 = scmp.ne.s32.totalorder %s27, %s30
      %p39 = scmp.eq.s32.totalorder %s22, 1
      %p40 = por %p38, %p39
      %p41 = scmp.ne.s32.totalorder %s30, %s31
      %p42 = scmp.eq.s32.totalorder %s22, 0
      %p43 = por %p41, %p42
      %p44 = scmp.ne.s32.totalorder %s30, %s31
      %p45 = scmp.eq.s32.totalorder %s23, 1
      %p46 = por %p44, %p45
      %p48 = scmp.ne.s32.totalorder %s31, %s47
      %p49 = scmp.eq.s32.totalorder %s23, 0
      %p50 = por %p48, %p49
      %s51 = ssub.s32 %s17, %s24
      %p52 = scmp.eq.s32.totalorder %s51, 0
      %s54 = sadd.s32 %s53, 1
      %s55 = scalar_select %p52, %s53, %s54
      %p58 = pneg %p52
      %p59 = scmp.eq.s32.totalorder %s17, 1
      %p60 = por %p58, %p59
      %p61 = scmp.ne.s32.totalorder %s53, %s56
      %p62 = scmp.eq.s32.totalorder %s17, 0
      %p63 = por %p61, %p62
      %p64 = scmp.ne.s32.totalorder %s53, %s56
      %p65 = scmp.eq.s32.totalorder %s22, 1
      %p66 = por %p64, %p65
      %p67 = scmp.ne.s32.totalorder %s56, %s57
      %p68 = scmp.eq.s32.totalorder %s22, 0
      %p69 = por %p67, %p68
      %p70 = scmp.ne.s32.totalorder %s56, %s57
      %p71 = scmp.eq.s32.totalorder %s23, 1
      %p72 = por %p70, %p71
      %p74 = scmp.ne.s32.totalorder %s57, %s73
      %p75 = scmp.eq.s32.totalorder %s23, 0
      %p76 = por %p74, %p75
      %s78 = sadd.s32 %s77, 1
      %p81 = scmp.eq.s32.totalorder %s17, 1
      %p82 = scmp.ne.s32.totalorder %s77, %s79
      %p83 = scmp.eq.s32.totalorder %s17, 0
      %p84 = por %p82, %p83
      %p85 = scmp.ne.s32.totalorder %s77, %s79
      %p86 = scmp.eq.s32.totalorder %s22, 1
      %p87 = por %p85, %p86
      %p88 = scmp.ne.s32.totalorder %s79, %s80
      %p89 = scmp.eq.s32.totalorder %s22, 0
      %p90 = por %p88, %p89
      %p91 = scmp.ne.s32.totalorder %s79, %s80
      %p92 = scmp.eq.s32.totalorder %s23, 1
      %p93 = por %p91, %p92
      %p95 = scmp.ne.s32.totalorder %s80, %s94
      %p96 = scmp.eq.s32.totalorder %s23, 0
      %p97 = por %p95, %p96
      %s99 = sadd.s32 %s98, 1
      %p102 = scmp.eq.s32.totalorder %s17, 1
      %p103 = scmp.ne.s32.totalorder %s98, %s100
      %p104 = scmp.eq.s32.totalorder %s17, 0
      %p105 = por %p103, %p104
      %p106 = scmp.ne.s32.totalorder %s98, %s100
      %p107 = scmp.eq.s32.totalorder %s22, 1
      %p108 = por %p106, %p107
      %p109 = scmp.ne.s32.totalorder %s100, %s101
      %p110 = scmp.eq.s32.totalorder %s22, 0
      %p111 = por %p109, %p110
      %p112 = scmp.ne.s32.totalorder %s100, %s101
      %p113 = scmp.eq.s32.totalorder %s23, 1
      %p114 = por %p112, %p113
      %p116 = scmp.ne.s32.totalorder %s101, %s115
      %p117 = scmp.eq.s32.totalorder %s23, 0
      %p118 = por %p116, %p117
      %s120 = sadd.s32 %s119, 1
      %p123 = scmp.eq.s32.totalorder %s17, 1
      %p124 = scmp.ne.s32.totalorder %s119, %s121
      %p125 = scmp.eq.s32.totalorder %s17, 0
      %p126 = por %p124, %p125
      %p127 = scmp.ne.s32.totalorder %s119, %s121
      %p128 = scmp.eq.s32.totalorder %s22, 1
      %p129 = por %p127, %p128
      %p130 = scmp.ne.s32.totalorder %s121, %s122
      %p131 = scmp.eq.s32.totalorder %s22, 0
      %p132 = por %p130, %p131
      %p133 = scmp.ne.s32.totalorder %s121, %s122
      %p134 = scmp.eq.s32.totalorder %s23, 1
      %p135 = por %p133, %p134
      %p137 = scmp.ne.s32.totalorder %s122, %s136
      %p138 = scmp.eq.s32.totalorder %s23, 0
      %p139 = por %p137, %p138
      %s141 = sadd.s32 %s140, 1
      %p144 = scmp.eq.s32.totalorder %s17, 1
      %p145 = scmp.ne.s32.totalorder %s140, %s142
      %p146 = scmp.eq.s32.totalorder %s17, 0
      %p147 = por %p145, %p146
      %p148 = scmp.ne.s32.totalorder %s140, %s142
      %p149 = scmp.eq.s32.totalorder %s22, 1
      %p150 = por %p148, %p149
      %p151 = scmp.ne.s32.totalorder %s142, %s143
      %p152 = scmp.eq.s32.totalorder %s22, 0
      %p153 = por %p151, %p152
      %p154 = scmp.ne.s32.totalorder %s142, %s143
      %p155 = scmp.eq.s32.totalorder %s23, 1
      %p156 = por %p154, %p155
      %p158 = scmp.ne.s32.totalorder %s143, %s157
      %p159 = scmp.eq.s32.totalorder %s23, 0
      %p160 = por %p158, %p159
      %s161 = ssub.s32 %s17, %s24
      %p162 = scmp.eq.s32.totalorder %s161, 0
      %s164 = sadd.s32 %s163, 1
      %s165 = scalar_select %p162, %s163, %s164
      %p168 = pneg %p162
      %p169 = scmp.eq.s32.totalorder %s17, 1
      %p170 = por %p168, %p169
      %p171 = scmp.ne.s32.totalorder %s163, %s166
      %p172 = scmp.eq.s32.totalorder %s17, 0
      %p173 = por %p171, %p172
      %p174 = scmp.ne.s32.totalorder %s163, %s166
      %p175 = scmp.eq.s32.totalorder %s22, 1
      %p176 = por %p174, %p175
      %p177 = scmp.ne.s32.totalorder %s166, %s167
      %p178 = scmp.eq.s32.totalorder %s22, 0
      %p179 = por %p177, %p178
      %p180 = scmp.ne.s32.totalorder %s166, %s167
      %p181 = scmp.eq.s32.totalorder %s23, 1
      %p182 = por %p180, %p181
      %p184 = scmp.ne.s32.totalorder %s167, %s183
      %p185 = scmp.eq.s32.totalorder %s23, 0
      %p186 = por %p184, %p185
      %p187 = scmp.le.s32.totalorder 1, %s17
      %p188 = scmp.lt.s32.totalorder %s17, 3
      %p189 = pnand %p187, %p188
      %p190 = pneg %p189
      // Predicated region
      $region9: #{tpu_custom_call.1} parent=5 // pred_check
        _
      $region10: #{tpu_custom_call.1} parent=5 // pred_check_branch
        %192 = sbr.rel (%p189) target = $region12
      $region11: #{tpu_custom_call.1} parent=5 // pred_region
        %s193 = ssub.s32 %s17, 1
        // Predicated region
        $region13: #{tpu_custom_call.1} parent=11 // pred_check
          %p194 = pneg %p90
        $region14: #{tpu_custom_call.1} parent=11 // pred_check_branch
          %196 = sbr.rel (%p194) target = $region16
        $region15: #{tpu_custom_call.1} parent=11 // pred_region
          _
        $region16: #{tpu_custom_call.1} parent=11 // pred_fallthru
          _
        // Predicated region
        $region17: #{tpu_custom_call.1} parent=11 // pred_check
          %p197 = pneg %p111
        $region18: #{tpu_custom_call.1} parent=11 // pred_check_branch
          %199 = sbr.rel (%p197) target = $region20
        $region19: #{tpu_custom_call.1} parent=11 // pred_region
          _
        $region20: #{tpu_custom_call.1} parent=11 // pred_fallthru
          _
        // Predicated region
        $region21: #{tpu_custom_call.1} parent=11 // pred_check
          %p200 = pneg %p132
        $region22: #{tpu_custom_call.1} parent=11 // pred_check_branch
          %202 = sbr.rel (%p200) target = $region24
        $region23: #{tpu_custom_call.1} parent=11 // pred_region
          _
        $region24: #{tpu_custom_call.1} parent=11 // pred_fallthru
          _
        // Predicated region
        $region25: #{tpu_custom_call.1} parent=11 // pred_check
          %p203 = pneg %p153
        $region26: #{tpu_custom_call.1} parent=11 // pred_check_branch
          %205 = sbr.rel (%p203) target = $region28
        $region27: #{tpu_custom_call.1} parent=11 // pred_region
          _
        $region28: #{tpu_custom_call.1} parent=11 // pred_fallthru
          _
      $region12: #{tpu_custom_call.1} parent=5 // pred_fallthru
        _
      %p206 = scmp.lt.s32.totalorder %s17, 2
      // Predicated region
      $region29: #{tpu_custom_call.1} parent=5 // pred_check
        %p207 = pneg %p206
      $region30: #{tpu_custom_call.1} parent=5 // pred_check_branch
        %209 = sbr.rel (%p207) target = $region32
      $region31: #{tpu_custom_call.1} parent=5 // pred_region
        // Predicated region
        $region33: #{tpu_custom_call.1} parent=31 // pred_check
          %p210 = pneg %p37
        $region34: #{tpu_custom_call.1} parent=31 // pred_check_branch
          %212 = sbr.rel (%p210) target = $region36
        $region35: #{tpu_custom_call.1} parent=31 // pred_region
          %p213 = scmp.lt.s32.totalorder %s17, 1
          %s214 = scalar_select %p213, %s17, 1
          %s215 = smul.addr %s214, 8
          %s216 = scalar_lea.vmem %s1, %s215
        $region36: #{tpu_custom_call.1} parent=31 // pred_fallthru
          _
        // Predicated region
        $region37: #{tpu_custom_call.1} parent=31 // pred_check
          %p217 = pneg %p63
        $region38: #{tpu_custom_call.1} parent=31 // pred_check_branch
          %219 = sbr.rel (%p217) target = $region40
        $region39: #{tpu_custom_call.1} parent=31 // pred_region
          %p220 = scmp.lt.s32.totalorder %s17, 1
          %s221 = scalar_select %p220, %s17, 1
          %s222 = smul.addr %s221, 8
          %s223 = scalar_lea.vmem %s2, %s222
        $region40: #{tpu_custom_call.1} parent=31 // pred_fallthru
          _
      $region32: #{tpu_custom_call.1} parent=5 // pred_fallthru
        _
      %p224 = scmp.le.s32.totalorder 1, %s17
      %p225 = scmp.lt.s32.totalorder %s17, 3
      %p226 = pnand %p224, %p225
      %p227 = pneg %p226
      // Predicated region
      $region41: #{tpu_custom_call.1} parent=5 // pred_check
        _
      $region42: #{tpu_custom_call.1} parent=5 // pred_check_branch
        %229 = sbr.rel (%p226) target = $region44
      $region43: #{tpu_custom_call.1} parent=5 // pred_region
        %s230 = ssub.s32 %s17, 1
        %p231 = scmp.lt.s32.totalorder %s22, 1
        %s232 = scalar_select %p231, %s22, 1
        %s233 = smul.addr %s232, 8
        %s234 = scalar_lea.vmem %s1, %s233
        %p235 = pneg %p43
        %p236 = pneg %p40
        %p237 = scmp.lt.s32.totalorder %s22, 1
        %s238 = scalar_select %p237, %s22, 1
        %s239 = smul.addr %s238, 8
        %s240 = scalar_lea.vmem %s2, %s239
        %p241 = pneg %p69
        %p242 = pneg %p66
        %p243 = pneg %p90
        %p244 = pneg %p87
        %p245 = pneg %p111
        %p246 = pneg %p108
        %p247 = pneg %p132
        %p248 = pneg %p129
        %p249 = pneg %p153
        %p250 = pneg %p150
        %p251 = pneg %p179
        %p252 = pneg %p176
        %s253 = sand.u32 %s166, 1
        %s254 = scalar_lea.sflag [#allocation5], %s253
        %s255 = sand.u32 %s166, 1
        %s256 = smul.addr %s255, 8
        %s257 = scalar_lea.vmem [#allocation4], %s256
        %p258 = scmp.lt.s32.totalorder %s22, 1
        %s259 = scalar_select %p258, %s22, 1
        %s260 = smul.addr %s259, 8
        %s261 = scalar_lea.vmem %s1, %s260
        %p262 = scmp.lt.s32.totalorder %s22, 1
        %s263 = scalar_select %p262, %s22, 1
        %s264 = smul.addr %s263, 8
        %s265 = scalar_lea.vmem %s2, %s264
        %v266 = vld [vmem:[%s261] sm:$0xff]
        %v267 = vld [vmem:[%s3] sm:$0xff]
        %v268 = vld [vmem:[%s3 + $0x8] sm:$0xff]
        %v269 = vld [vmem:[%s3 + $0x10] sm:$0xff]
        %v270 = vld [vmem:[%s3 + $0x18] sm:$0xff]
        %v271 = vld [vmem:[%s3 + $0x20] sm:$0xff]
        %v272 = vld [vmem:[%s3 + $0x28] sm:$0xff]
        %v273 = vld [vmem:[%s3 + $0x30] sm:$0xff]
        %v274 = vld [vmem:[%s3 + $0x38] sm:$0xff]
        %v275 = vld [vmem:[%s3 + $0x40] sm:$0xff]
        %v276 = vld [vmem:[%s3 + $0x48] sm:$0xff]
        %v277 = vld [vmem:[%s3 + $0x50] sm:$0xff]
        %v278 = vld [vmem:[%s3 + $0x58] sm:$0xff]
        %v279 = vld [vmem:[%s3 + $0x60] sm:$0xff]
        %v280 = vld [vmem:[%s3 + $0x68] sm:$0xff]
        %v281 = vld [vmem:[%s3 + $0x70] sm:$0xff]
        %v282 = vld [vmem:[%s3 + $0x78] sm:$0xff]
        %v283 = vld [vmem:[%s4] sm:$0x1]
        %v285 = vlaneseq
        %v286 = vshrl.u32 %v285, 7
        %v287 = vsub.s32 0, %v286
        %v288 = vrot.slane %v283, %v287
        %vm290 = vcmask 523264
        %v292 = vsel %vm290, %v266, 0
        %v295 = vsel %vm290, %v267, 0
        %v298 = vsel %vm290, %v268, 0
        %v301 = vsel %vm290, %v269, 0
        %v304 = vsel %vm290, %v270, 0
        %v307 = vsel %vm290, %v271, 0
        %v310 = vsel %vm290, %v272, 0
        %v313 = vsel %vm290, %v273, 0
        %v316 = vsel %vm290, %v274, 0
        %v319 = vsel %vm290, %v275, 0
        %v322 = vsel %vm290, %v276, 0
        %v325 = vsel %vm290, %v277, 0
        %v328 = vsel %vm290, %v278, 0
        %v331 = vsel %vm290, %v279, 0
        %v334 = vsel %vm290, %v280, 0
        %v337 = vsel %vm290, %v281, 0
        %v340 = vsel %vm290, %v282, 0
        %342 = vmatprep.subr.mxu0 0.0
        %v343 = vand.u32 %v340, 4294901760
        %344 = vmatpush1.xpose.msra.mxu0 %v343
        %345 = vmatprep.subr.mxu0 0.0
        %v346 = vand.u32 %v337, 4294901760
        %347 = vmatpush1.xpose.msra.mxu0 %v346
        %348 = vmatprep.subr.mxu0 0.0
        %v349 = vand.u32 %v334, 4294901760
        %350 = vmatpush1.xpose.msra.mxu0 %v349
        %351 = vmatprep.subr.mxu0 0.0
        %v352 = vand.u32 %v331, 4294901760
        %353 = vmatpush1.xpose.msra.mxu0 %v352
        %354 = vmatprep.subr.mxu0 0.0
        %v355 = vand.u32 %v328, 4294901760
        %356 = vmatpush1.xpose.msra.mxu0 %v355
        %357 = vmatprep.subr.mxu0 0.0
        %v358 = vand.u32 %v325, 4294901760
        %359 = vmatpush1.xpose.msra.mxu0 %v358
        %360 = vmatprep.subr.mxu0 0.0
        %v361 = vand.u32 %v322, 4294901760
        %362 = vmatpush1.xpose.msra.mxu0 %v361
        %363 = vmatprep.subr.mxu0 0.0
        %v364 = vand.u32 %v319, 4294901760
        %365 = vmatpush1.xpose.msra.mxu0 %v364
        %366 = vmatprep.subr.mxu0 0.0
        %v367 = vand.u32 %v316, 4294901760
        %368 = vmatpush1.xpose.msra.mxu0 %v367
        %369 = vmatprep.subr.mxu0 0.0
        %v370 = vand.u32 %v313, 4294901760
        %371 = vmatpush1.xpose.msra.mxu0 %v370
        %372 = vmatprep.subr.mxu0 0.0
        %v373 = vand.u32 %v310, 4294901760
        %374 = vmatpush1.xpose.msra.mxu0 %v373
        %375 = vmatprep.subr.mxu0 0.0
        %v376 = vand.u32 %v307, 4294901760
        %377 = vmatpush1.xpose.msra.mxu0 %v376
        %378 = vmatprep.subr.mxu0 0.0
        %v379 = vand.u32 %v304, 4294901760
        %380 = vmatpush1.xpose.msra.mxu0 %v379
        %381 = vmatprep.subr.mxu0 0.0
        %v382 = vand.u32 %v301, 4294901760
        %383 = vmatpush1.xpose.msra.mxu0 %v382
        %384 = vmatprep.subr.mxu0 0.0
        %v385 = vand.u32 %v298, 4294901760
        %386 = vmatpush1.xpose.msra.mxu0 %v385
        %387 = vmatprep.subr.mxu0 0.0
        %v388 = vand.u32 %v295, 4294901760
        %389 = vmatpush1.xpose.msra.mxu0 %v388
        %390 = vmatprep.subr.mxu0 0.0
        %391 = vmatpush2.xpose.msra.mxu0 0.0
        %392 = vmatprep.subr.mxu0 0.0
        %393 = vmatpush2.xpose.msra.mxu0 0.0
        %394 = vmatprep.subr.mxu0 0.0
        %395 = vmatpush2.xpose.msra.mxu0 0.0
        %396 = vmatprep.subr.mxu0 0.0
        %397 = vmatpush2.xpose.msra.mxu0 0.0
        %398 = vmatprep.subr.mxu0 0.0
        %399 = vmatpush2.xpose.msra.mxu0 0.0
        %400 = vmatprep.subr.mxu0 0.0
        %401 = vmatpush2.xpose.msra.mxu0 0.0
        %402 = vmatprep.subr.mxu0 0.0
        %403 = vmatpush2.xpose.msra.mxu0 0.0
        %404 = vmatprep.subr.mxu0 0.0
        %405 = vmatpush2.xpose.msra.mxu0 0.0
        %406 = vmatprep.subr.mxu0 0.0
        %407 = vmatpush2.xpose.msra.mxu0 0.0
        %408 = vmatprep.subr.mxu0 0.0
        %409 = vmatpush2.xpose.msra.mxu0 0.0
        %410 = vmatprep.subr.mxu0 0.0
        %411 = vmatpush2.xpose.msra.mxu0 0.0
        %412 = vmatprep.subr.mxu0 0.0
        %413 = vmatpush2.xpose.msra.mxu0 0.0
        %414 = vmatprep.subr.mxu0 0.0
        %415 = vmatpush2.xpose.msra.mxu0 0.0
        %416 = vmatprep.subr.mxu0 0.0
        %417 = vmatpush2.xpose.msra.mxu0 0.0
        %418 = vmatprep.subr.mxu0 0.0
        %419 = vmatpush2.xpose.msra.mxu0 0.0
        %420 = vmatprep.subr.mxu0 0.0
        %421 = vmatpush2.xpose.msra.mxu0 0.0
        %422 = vmatprep.mubr.f32.mxu0 0.0
        %v423 = vand.u32 %v292, 4294901760
        %v424 = vsub.f32 %v292, %v423
        %v425 = vand.u32 %v424, 4294901760
        %v426 = vsub.f32 %v424, %v425
        %v427 = vand.u32 %v426, 4294901760
        %428 = vmatmul.mubr.f32.gmra.mxu0 %v427
        %v429 = vpop.f32.mrf.mxu0
        %v430 = vadd.f32 %v288, %v429
        %v431 = vpop.f32.mrf.mxu0
        %432 = vdwg.mxu0
        %433 = vmatprep.subr.mxu0 0.0
        %v434 = vand.u32 %v340, 4294901760
        %v435 = vsub.f32 %v340, %v434
        %v436 = vand.u32 %v435, 4294901760
        %v437 = vsub.f32 %v435, %v436
        %v438 = vand.u32 %v437, 4294901760
        %439 = vmatpush1.xpose.msra.mxu0 %v438
        %440 = vmatprep.subr.mxu0 0.0
        %v441 = vand.u32 %v337, 4294901760
        %v442 = vsub.f32 %v337, %v441
        %v443 = vand.u32 %v442, 4294901760
        %v444 = vsub.f32 %v442, %v443
        %v445 = vand.u32 %v444, 4294901760
        %446 = vmatpush1.xpose.msra.mxu0 %v445
        %447 = vmatprep.subr.mxu0 0.0
        %v448 = vand.u32 %v334, 4294901760
        %v449 = vsub.f32 %v334, %v448
        %v450 = vand.u32 %v449, 4294901760
        %v451 = vsub.f32 %v449, %v450
        %v452 = vand.u32 %v451, 4294901760
        %453 = vmatpush1.xpose.msra.mxu0 %v452
        %454 = vmatprep.subr.mxu0 0.0
        %v455 = vand.u32 %v331, 4294901760
        %v456 = vsub.f32 %v331, %v455
        %v457 = vand.u32 %v456, 4294901760
        %v458 = vsub.f32 %v456, %v457
        %v459 = vand.u32 %v458, 4294901760
        %460 = vmatpush1.xpose.msra.mxu0 %v459
        %461 = vmatprep.subr.mxu0 0.0
        %v462 = vand.u32 %v328, 4294901760
        %v463 = vsub.f32 %v328, %v462
        %v464 = vand.u32 %v463, 4294901760
        %v465 = vsub.f32 %v463, %v464
        %v466 = vand.u32 %v465, 4294901760
        %467 = vmatpush1.xpose.msra.mxu0 %v466
        %468 = vmatprep.subr.mxu0 0.0
        %v469 = vand.u32 %v325, 4294901760
        %v470 = vsub.f32 %v325, %v469
        %v471 = vand.u32 %v470, 4294901760
        %v472 = vsub.f32 %v470, %v471
        %v473 = vand.u32 %v472, 4294901760
        %474 = vmatpush1.xpose.msra.mxu0 %v473
        %475 = vmatprep.subr.mxu0 0.0
        %v476 = vand.u32 %v322, 4294901760
        %v477 = vsub.f32 %v322, %v476
        %v478 = vand.u32 %v477, 4294901760
        %v479 = vsub.f32 %v477, %v478
        %v480 = vand.u32 %v479, 4294901760
        %481 = vmatpush1.xpose.msra.mxu0 %v480
        %482 = vmatprep.subr.mxu0 0.0
        %v483 = vand.u32 %v319, 4294901760
        %v484 = vsub.f32 %v319, %v483
        %v485 = vand.u32 %v484, 4294901760
        %v486 = vsub.f32 %v484, %v485
        %v487 = vand.u32 %v486, 4294901760
        %488 = vmatpush1.xpose.msra.mxu0 %v487
        %489 = vmatprep.subr.mxu0 0.0
        %v490 = vand.u32 %v316, 4294901760
        %v491 = vsub.f32 %v316, %v490
        %v492 = vand.u32 %v491, 4294901760
        %v493 = vsub.f32 %v491, %v492
        %v494 = vand.u32 %v493, 4294901760
        %495 = vmatpush1.xpose.msra.mxu0 %v494
        %496 = vmatprep.subr.mxu0 0.0
        %v497 = vand.u32 %v313, 4294901760
        %v498 = vsub.f32 %v313, %v497
        %v499 = vand.u32 %v498, 4294901760
        %v500 = vsub.f32 %v498, %v499
        %v501 = vand.u32 %v500, 4294901760
        %502 = vmatpush1.xpose.msra.mxu0 %v501
        %503 = vmatprep.subr.mxu0 0.0
        %v504 = vand.u32 %v310, 4294901760
        %v505 = vsub.f32 %v310, %v504
        %v506 = vand.u32 %v505, 4294901760
        %v507 = vsub.f32 %v505, %v506
        %v508 = vand.u32 %v507, 4294901760
        %509 = vmatpush1.xpose.msra.mxu0 %v508
        %510 = vmatprep.subr.mxu0 0.0
        %v511 = vand.u32 %v307, 4294901760
        %v512 = vsub.f32 %v307, %v511
        %v513 = vand.u32 %v512, 4294901760
        %v514 = vsub.f32 %v512, %v513
        %v515 = vand.u32 %v514, 4294901760
        %516 = vmatpush1.xpose.msra.mxu0 %v515
        %517 = vmatprep.subr.mxu0 0.0
        %v518 = vand.u32 %v304, 4294901760
        %v519 = vsub.f32 %v304, %v518
        %v520 = vand.u32 %v519, 4294901760
        %v521 = vsub.f32 %v519, %v520
        %v522 = vand.u32 %v521, 4294901760
        %523 = vmatpush1.xpose.msra.mxu0 %v522
        %524 = vmatprep.subr.mxu0 0.0
        %v525 = vand.u32 %v301, 4294901760
        %v526 = vsub.f32 %v301, %v525
        %v527 = vand.u32 %v526, 4294901760
        %v528 = vsub.f32 %v526, %v527
        %v529 = vand.u32 %v528, 4294901760
        %530 = vmatpush1.xpose.msra.mxu0 %v529
        %531 = vmatprep.subr.mxu0 0.0
        %v532 = vand.u32 %v298, 4294901760
        %v533 = vsub.f32 %v298, %v532
        %v534 = vand.u32 %v533, 4294901760
        %v535 = vsub.f32 %v533, %v534
        %v536 = vand.u32 %v535, 4294901760
        %537 = vmatpush1.xpose.msra.mxu0 %v536
        %538 = vmatprep.subr.mxu0 0.0
        %v539 = vand.u32 %v295, 4294901760
        %v540 = vsub.f32 %v295, %v539
        %v541 = vand.u32 %v540, 4294901760
        %v542 = vsub.f32 %v540, %v541
        %v543 = vand.u32 %v542, 4294901760
        %544 = vmatpush1.xpose.msra.mxu0 %v543
        %545 = vmatprep.subr.mxu0 0.0
        %546 = vmatpush2.xpose.msra.mxu0 0.0
        %547 = vmatprep.subr.mxu0 0.0
        %548 = vmatpush2.xpose.msra.mxu0 0.0
        %549 = vmatprep.subr.mxu0 0.0
        %550 = vmatpush2.xpose.msra.mxu0 0.0
        %551 = vmatprep.subr.mxu0 0.0
        %552 = vmatpush2.xpose.msra.mxu0 0.0
        %553 = vmatprep.subr.mxu0 0.0
        %554 = vmatpush2.xpose.msra.mxu0 0.0
        %555 = vmatprep.subr.mxu0 0.0
        %556 = vmatpush2.xpose.msra.mxu0 0.0
        %557 = vmatprep.subr.mxu0 0.0
        %558 = vmatpush2.xpose.msra.mxu0 0.0
        %559 = vmatprep.subr.mxu0 0.0
        %560 = vmatpush2.xpose.msra.mxu0 0.0
        %561 = vmatprep.subr.mxu0 0.0
        %562 = vmatpush2.xpose.msra.mxu0 0.0
        %563 = vmatprep.subr.mxu0 0.0
        %564 = vmatpush2.xpose.msra.mxu0 0.0
        %565 = vmatprep.subr.mxu0 0.0
        %566 = vmatpush2.xpose.msra.mxu0 0.0
        %567 = vmatprep.subr.mxu0 0.0
        %568 = vmatpush2.xpose.msra.mxu0 0.0
        %569 = vmatprep.subr.mxu0 0.0
        %570 = vmatpush2.xpose.msra.mxu0 0.0
        %571 = vmatprep.subr.mxu0 0.0
        %572 = vmatpush2.xpose.msra.mxu0 0.0
        %573 = vmatprep.subr.mxu0 0.0
        %574 = vmatpush2.xpose.msra.mxu0 0.0
        %575 = vmatprep.subr.mxu0 0.0
        %576 = vmatpush2.xpose.msra.mxu0 0.0
        %577 = vmatprep.mubr.f32.mxu0 0.0
        %v578 = vand.u32 %v292, 4294901760
        %579 = vmatmul.mubr.f32.gmra.mxu0 %v578
        %v580 = vpop.f32.mrf.mxu0
        %v581 = vadd.f32 %v430, %v580
        %v582 = vpop.f32.mrf.mxu0
        %583 = vdwg.mxu0
        %584 = vmatprep.subr.mxu0 0.0
        %v585 = vand.u32 %v340, 4294901760
        %v586 = vsub.f32 %v340, %v585
        %587 = vmatpush1.xpose.msra.mxu0 %v586
        %588 = vmatprep.subr.mxu0 0.0
        %v589 = vand.u32 %v337, 4294901760
        %v590 = vsub.f32 %v337, %v589
        %591 = vmatpush1.xpose.msra.mxu0 %v590
        %592 = vmatprep.subr.mxu0 0.0
        %v593 = vand.u32 %v334, 4294901760
        %v594 = vsub.f32 %v334, %v593
        %595 = vmatpush1.xpose.msra.mxu0 %v594
        %596 = vmatprep.subr.mxu0 0.0
        %v597 = vand.u32 %v331, 4294901760
        %v598 = vsub.f32 %v331, %v597
        %599 = vmatpush1.xpose.msra.mxu0 %v598
        %600 = vmatprep.subr.mxu0 0.0
        %v601 = vand.u32 %v328, 4294901760
        %v602 = vsub.f32 %v328, %v601
        %603 = vmatpush1.xpose.msra.mxu0 %v602
        %604 = vmatprep.subr.mxu0 0.0
        %v605 = vand.u32 %v325, 4294901760
        %v606 = vsub.f32 %v325, %v605
        %607 = vmatpush1.xpose.msra.mxu0 %v606
        %608 = vmatprep.subr.mxu0 0.0
        %v609 = vand.u32 %v322, 4294901760
        %v610 = vsub.f32 %v322, %v609
        %611 = vmatpush1.xpose.msra.mxu0 %v610
        %612 = vmatprep.subr.mxu0 0.0
        %v613 = vand.u32 %v319, 4294901760
        %v614 = vsub.f32 %v319, %v613
        %615 = vmatpush1.xpose.msra.mxu0 %v614
        %616 = vmatprep.subr.mxu0 0.0
        %v617 = vand.u32 %v316, 4294901760
        %v618 = vsub.f32 %v316, %v617
        %619 = vmatpush1.xpose.msra.mxu0 %v618
        %620 = vmatprep.subr.mxu0 0.0
        %v621 = vand.u32 %v313, 4294901760
        %v622 = vsub.f32 %v313, %v621
        %623 = vmatpush1.xpose.msra.mxu0 %v622
        %624 = vmatprep.subr.mxu0 0.0
        %v625 = vand.u32 %v310, 4294901760
        %v626 = vsub.f32 %v310, %v625
        %627 = vmatpush1.xpose.msra.mxu0 %v626
        %628 = vmatprep.subr.mxu0 0.0
        %v629 = vand.u32 %v307, 4294901760
        %v630 = vsub.f32 %v307, %v629
        %631 = vmatpush1.xpose.msra.mxu0 %v630
        %632 = vmatprep.subr.mxu0 0.0
        %v633 = vand.u32 %v304, 4294901760
        %v634 = vsub.f32 %v304, %v633
        %635 = vmatpush1.xpose.msra.mxu0 %v634
        %636 = vmatprep.subr.mxu0 0.0
        %v637 = vand.u32 %v301, 4294901760
        %v638 = vsub.f32 %v301, %v637
        %639 = vmatpush1.xpose.msra.mxu0 %v638
        %640 = vmatprep.subr.mxu0 0.0
        %v641 = vand.u32 %v298, 4294901760
        %v642 = vsub.f32 %v298, %v641
        %643 = vmatpush1.xpose.msra.mxu0 %v642
        %644 = vmatprep.subr.mxu0 0.0
        %v645 = vand.u32 %v295, 4294901760
        %v646 = vsub.f32 %v295, %v645
        %647 = vmatpush1.xpose.msra.mxu0 %v646
        %648 = vmatprep.subr.mxu0 0.0
        %649 = vmatpush2.xpose.msra.mxu0 0.0
        %650 = vmatprep.subr.mxu0 0.0
        %651 = vmatpush2.xpose.msra.mxu0 0.0
        %652 = vmatprep.subr.mxu0 0.0
        %653 = vmatpush2.xpose.msra.mxu0 0.0
        %654 = vmatprep.subr.mxu0 0.0
        %655 = vmatpush2.xpose.msra.mxu0 0.0
        %656 = vmatprep.subr.mxu0 0.0
        %657 = vmatpush2.xpose.msra.mxu0 0.0
        %658 = vmatprep.subr.mxu0 0.0
        %659 = vmatpush2.xpose.msra.mxu0 0.0
        %660 = vmatprep.subr.mxu0 0.0
        %661 = vmatpush2.xpose.msra.mxu0 0.0
        %662 = vmatprep.subr.mxu0 0.0
        %663 = vmatpush2.xpose.msra.mxu0 0.0
        %664 = vmatprep.subr.mxu0 0.0
        %665 = vmatpush2.xpose.msra.mxu0 0.0
        %666 = vmatprep.subr.mxu0 0.0
        %667 = vmatpush2.xpose.msra.mxu0 0.0
        %668 = vmatprep.subr.mxu0 0.0
        %669 = vmatpush2.xpose.msra.mxu0 0.0
        %670 = vmatprep.subr.mxu0 0.0
        %671 = vmatpush2.xpose.msra.mxu0 0.0
        %672 = vmatprep.subr.mxu0 0.0
        %673 = vmatpush2.xpose.msra.mxu0 0.0
        %674 = vmatprep.subr.mxu0 0.0
        %675 = vmatpush2.xpose.msra.mxu0 0.0
        %676 = vmatprep.subr.mxu0 0.0
        %677 = vmatpush2.xpose.msra.mxu0 0.0
        %678 = vmatprep.subr.mxu0 0.0
        %679 = vmatpush2.xpose.msra.mxu0 0.0
        %680 = vmatprep.mubr.f32.mxu0 0.0
        %v681 = vand.u32 %v292, 4294901760
        %v682 = vsub.f32 %v292, %v681
        %683 = vmatmul.mubr.f32.gmra.mxu0 %v682
        %v684 = vpop.f32.mrf.mxu0
        %v685 = vadd.f32 %v581, %v684
        %v686 = vpop.f32.mrf.mxu0
        %687 = vdwg.mxu0
        %688 = vmatprep.subr.mxu0 0.0
        %v689 = vand.u32 %v340, 4294901760
        %690 = vmatpush1.xpose.msra.mxu0 %v689
        %691 = vmatprep.subr.mxu0 0.0
        %v692 = vand.u32 %v337, 4294901760
        %693 = vmatpush1.xpose.msra.mxu0 %v692
        %694 = vmatprep.subr.mxu0 0.0
        %v695 = vand.u32 %v334, 4294901760
        %696 = vmatpush1.xpose.msra.mxu0 %v695
        %697 = vmatprep.subr.mxu0 0.0
        %v698 = vand.u32 %v331, 4294901760
        %699 = vmatpush1.xpose.msra.mxu0 %v698
        %700 = vmatprep.subr.mxu0 0.0
        %v701 = vand.u32 %v328, 4294901760
        %702 = vmatpush1.xpose.msra.mxu0 %v701
        %703 = vmatprep.subr.mxu0 0.0
        %v704 = vand.u32 %v325, 4294901760
        %705 = vmatpush1.xpose.msra.mxu0 %v704
        %706 = vmatprep.subr.mxu0 0.0
        %v707 = vand.u32 %v322, 4294901760
        %708 = vmatpush1.xpose.msra.mxu0 %v707
        %709 = vmatprep.subr.mxu0 0.0
        %v710 = vand.u32 %v319, 4294901760
        %711 = vmatpush1.xpose.msra.mxu0 %v710
        %712 = vmatprep.subr.mxu0 0.0
        %v713 = vand.u32 %v316, 4294901760
        %714 = vmatpush1.xpose.msra.mxu0 %v713
        %715 = vmatprep.subr.mxu0 0.0
        %v716 = vand.u32 %v313, 4294901760
        %717 = vmatpush1.xpose.msra.mxu0 %v716
        %718 = vmatprep.subr.mxu0 0.0
        %v719 = vand.u32 %v310, 4294901760
        %720 = vmatpush1.xpose.msra.mxu0 %v719
        %721 = vmatprep.subr.mxu0 0.0
        %v722 = vand.u32 %v307, 4294901760
        %723 = vmatpush1.xpose.msra.mxu0 %v722
        %724 = vmatprep.subr.mxu0 0.0
        %v725 = vand.u32 %v304, 4294901760
        %726 = vmatpush1.xpose.msra.mxu0 %v725
        %727 = vmatprep.subr.mxu0 0.0
        %v728 = vand.u32 %v301, 4294901760
        %729 = vmatpush1.xpose.msra.mxu0 %v728
        %730 = vmatprep.subr.mxu0 0.0
        %v731 = vand.u32 %v298, 4294901760
        %732 = vmatpush1.xpose.msra.mxu0 %v731
        %733 = vmatprep.subr.mxu0 0.0
        %v734 = vand.u32 %v295, 4294901760
        %735 = vmatpush1.xpose.msra.mxu0 %v734
        %736 = vmatprep.subr.mxu0 0.0
        %737 = vmatpush2.xpose.msra.mxu0 0.0
        %738 = vmatprep.subr.mxu0 0.0
        %739 = vmatpush2.xpose.msra.mxu0 0.0
        %740 = vmatprep.subr.mxu0 0.0
        %741 = vmatpush2.xpose.msra.mxu0 0.0
        %742 = vmatprep.subr.mxu0 0.0
        %743 = vmatpush2.xpose.msra.mxu0 0.0
        %744 = vmatprep.subr.mxu0 0.0
        %745 = vmatpush2.xpose.msra.mxu0 0.0
        %746 = vmatprep.subr.mxu0 0.0
        %747 = vmatpush2.xpose.msra.mxu0 0.0
        %748 = vmatprep.subr.mxu0 0.0
        %749 = vmatpush2.xpose.msra.mxu0 0.0
        %750 = vmatprep.subr.mxu0 0.0
        %751 = vmatpush2.xpose.msra.mxu0 0.0
        %752 = vmatprep.subr.mxu0 0.0
        %753 = vmatpush2.xpose.msra.mxu0 0.0
        %754 = vmatprep.subr.mxu0 0.0
        %755 = vmatpush2.xpose.msra.mxu0 0.0
        %756 = vmatprep.subr.mxu0 0.0
        %757 = vmatpush2.xpose.msra.mxu0 0.0
        %758 = vmatprep.subr.mxu0 0.0
        %759 = vmatpush2.xpose.msra.mxu0 0.0
        %760 = vmatprep.subr.mxu0 0.0
        %761 = vmatpush2.xpose.msra.mxu0 0.0
        %762 = vmatprep.subr.mxu0 0.0
        %763 = vmatpush2.xpose.msra.mxu0 0.0
        %764 = vmatprep.subr.mxu0 0.0
        %765 = vmatpush2.xpose.msra.mxu0 0.0
        %766 = vmatprep.subr.mxu0 0.0
        %767 = vmatpush2.xpose.msra.mxu0 0.0
        %768 = vmatprep.mubr.f32.mxu0 0.0
        %v769 = vand.u32 %v292, 4294901760
        %v770 = vsub.f32 %v292, %v769
        %v771 = vand.u32 %v770, 4294901760
        %772 = vmatmul.mubr.f32.gmra.mxu0 %v771
        %v773 = vpop.f32.mrf.mxu0
        %v774 = vadd.f32 %v685, %v773
        %v775 = vpop.f32.mrf.mxu0
        %776 = vdwg.mxu0
        %777 = vmatprep.subr.mxu0 0.0
        %v778 = vand.u32 %v340, 4294901760
        %v779 = vsub.f32 %v340, %v778
        %v780 = vand.u32 %v779, 4294901760
        %781 = vmatpush1.xpose.msra.mxu0 %v780
        %782 = vmatprep.subr.mxu0 0.0
        %v783 = vand.u32 %v337, 4294901760
        %v784 = vsub.f32 %v337, %v783
        %v785 = vand.u32 %v784, 4294901760
        %786 = vmatpush1.xpose.msra.mxu0 %v785
        %787 = vmatprep.subr.mxu0 0.0
        %v788 = vand.u32 %v334, 4294901760
        %v789 = vsub.f32 %v334, %v788
        %v790 = vand.u32 %v789, 4294901760
        %791 = vmatpush1.xpose.msra.mxu0 %v790
        %792 = vmatprep.subr.mxu0 0.0
        %v793 = vand.u32 %v331, 4294901760
        %v794 = vsub.f32 %v331, %v793
        %v795 = vand.u32 %v794, 4294901760
        %796 = vmatpush1.xpose.msra.mxu0 %v795
        %797 = vmatprep.subr.mxu0 0.0
        %v798 = vand.u32 %v328, 4294901760
        %v799 = vsub.f32 %v328, %v798
        %v800 = vand.u32 %v799, 4294901760
        %801 = vmatpush1.xpose.msra.mxu0 %v800
        %802 = vmatprep.subr.mxu0 0.0
        %v803 = vand.u32 %v325, 4294901760
        %v804 = vsub.f32 %v325, %v803
        %v805 = vand.u32 %v804, 4294901760
        %806 = vmatpush1.xpose.msra.mxu0 %v805
        %807 = vmatprep.subr.mxu0 0.0
        %v808 = vand.u32 %v322, 4294901760
        %v809 = vsub.f32 %v322, %v808
        %v810 = vand.u32 %v809, 4294901760
        %811 = vmatpush1.xpose.msra.mxu0 %v810
        %812 = vmatprep.subr.mxu0 0.0
        %v813 = vand.u32 %v319, 4294901760
        %v814 = vsub.f32 %v319, %v813
        %v815 = vand.u32 %v814, 4294901760
        %816 = vmatpush1.xpose.msra.mxu0 %v815
        %817 = vmatprep.subr.mxu0 0.0
        %v818 = vand.u32 %v316, 4294901760
        %v819 = vsub.f32 %v316, %v818
        %v820 = vand.u32 %v819, 4294901760
        %821 = vmatpush1.xpose.msra.mxu0 %v820
        %822 = vmatprep.subr.mxu0 0.0
        %v823 = vand.u32 %v313, 4294901760
        %v824 = vsub.f32 %v313, %v823
        %v825 = vand.u32 %v824, 4294901760
        %826 = vmatpush1.xpose.msra.mxu0 %v825
        %827 = vmatprep.subr.mxu0 0.0
        %v828 = vand.u32 %v310, 4294901760
        %v829 = vsub.f32 %v310, %v828
        %v830 = vand.u32 %v829, 4294901760
        %831 = vmatpush1.xpose.msra.mxu0 %v830
        %832 = vmatprep.subr.mxu0 0.0
        %v833 = vand.u32 %v307, 4294901760
        %v834 = vsub.f32 %v307, %v833
        %v835 = vand.u32 %v834, 4294901760
        %836 = vmatpush1.xpose.msra.mxu0 %v835
        %837 = vmatprep.subr.mxu0 0.0
        %v838 = vand.u32 %v304, 4294901760
        %v839 = vsub.f32 %v304, %v838
        %v840 = vand.u32 %v839, 4294901760
        %841 = vmatpush1.xpose.msra.mxu0 %v840
        %842 = vmatprep.subr.mxu0 0.0
        %v843 = vand.u32 %v301, 4294901760
        %v844 = vsub.f32 %v301, %v843
        %v845 = vand.u32 %v844, 4294901760
        %846 = vmatpush1.xpose.msra.mxu0 %v845
        %847 = vmatprep.subr.mxu0 0.0
        %v848 = vand.u32 %v298, 4294901760
        %v849 = vsub.f32 %v298, %v848
        %v850 = vand.u32 %v849, 4294901760
        %851 = vmatpush1.xpose.msra.mxu0 %v850
        %852 = vmatprep.subr.mxu0 0.0
        %v853 = vand.u32 %v295, 4294901760
        %v854 = vsub.f32 %v295, %v853
        %v855 = vand.u32 %v854, 4294901760
        %856 = vmatpush1.xpose.msra.mxu0 %v855
        %857 = vmatprep.subr.mxu0 0.0
        %858 = vmatpush2.xpose.msra.mxu0 0.0
        %859 = vmatprep.subr.mxu0 0.0
        %860 = vmatpush2.xpose.msra.mxu0 0.0
        %861 = vmatprep.subr.mxu0 0.0
        %862 = vmatpush2.xpose.msra.mxu0 0.0
        %863 = vmatprep.subr.mxu0 0.0
        %864 = vmatpush2.xpose.msra.mxu0 0.0
        %865 = vmatprep.subr.mxu0 0.0
        %866 = vmatpush2.xpose.msra.mxu0 0.0
        %867 = vmatprep.subr.mxu0 0.0
        %868 = vmatpush2.xpose.msra.mxu0 0.0
        %869 = vmatprep.subr.mxu0 0.0
        %870 = vmatpush2.xpose.msra.mxu0 0.0
        %871 = vmatprep.subr.mxu0 0.0
        %872 = vmatpush2.xpose.msra.mxu0 0.0
        %873 = vmatprep.subr.mxu0 0.0
        %874 = vmatpush2.xpose.msra.mxu0 0.0
        %875 = vmatprep.subr.mxu0 0.0
        %876 = vmatpush2.xpose.msra.mxu0 0.0
        %877 = vmatprep.subr.mxu0 0.0
        %878 = vmatpush2.xpose.msra.mxu0 0.0
        %879 = vmatprep.subr.mxu0 0.0
        %880 = vmatpush2.xpose.msra.mxu0 0.0
        %881 = vmatprep.subr.mxu0 0.0
        %882 = vmatpush2.xpose.msra.mxu0 0.0
        %883 = vmatprep.subr.mxu0 0.0
        %884 = vmatpush2.xpose.msra.mxu0 0.0
        %885 = vmatprep.subr.mxu0 0.0
        %886 = vmatpush2.xpose.msra.mxu0 0.0
        %887 = vmatprep.subr.mxu0 0.0
        %888 = vmatpush2.xpose.msra.mxu0 0.0
        %889 = vmatprep.mubr.f32.mxu0 0.0
        %v890 = vand.u32 %v292, 4294901760
        %891 = vmatmul.mubr.f32.gmra.mxu0 %v890
        %v892 = vpop.f32.mrf.mxu0
        %v893 = vadd.f32 %v774, %v892
        %v894 = vpop.f32.mrf.mxu0
        %895 = vdwg.mxu0
        %896 = vmatprep.subr.mxu0 0.0
        %v897 = vand.u32 %v340, 4294901760
        %898 = vmatpush1.xpose.msra.mxu0 %v897
        %899 = vmatprep.subr.mxu0 0.0
        %v900 = vand.u32 %v337, 4294901760
        %901 = vmatpush1.xpose.msra.mxu0 %v900
        %902 = vmatprep.subr.mxu0 0.0
        %v903 = vand.u32 %v334, 4294901760
        %904 = vmatpush1.xpose.msra.mxu0 %v903
        %905 = vmatprep.subr.mxu0 0.0
        %v906 = vand.u32 %v331, 4294901760
        %907 = vmatpush1.xpose.msra.mxu0 %v906
        %908 = vmatprep.subr.mxu0 0.0
        %v909 = vand.u32 %v328, 4294901760
        %910 = vmatpush1.xpose.msra.mxu0 %v909
        %911 = vmatprep.subr.mxu0 0.0
        %v912 = vand.u32 %v325, 4294901760
        %913 = vmatpush1.xpose.msra.mxu0 %v912
        %914 = vmatprep.subr.mxu0 0.0
        %v915 = vand.u32 %v322, 4294901760
        %916 = vmatpush1.xpose.msra.mxu0 %v915
        %917 = vmatprep.subr.mxu0 0.0
        %v918 = vand.u32 %v319, 4294901760
        %919 = vmatpush1.xpose.msra.mxu0 %v918
        %920 = vmatprep.subr.mxu0 0.0
        %v921 = vand.u32 %v316, 4294901760
        %922 = vmatpush1.xpose.msra.mxu0 %v921
        %923 = vmatprep.subr.mxu0 0.0
        %v924 = vand.u32 %v313, 4294901760
        %925 = vmatpush1.xpose.msra.mxu0 %v924
        %926 = vmatprep.subr.mxu0 0.0
        %v927 = vand.u32 %v310, 4294901760
        %928 = vmatpush1.xpose.msra.mxu0 %v927
        %929 = vmatprep.subr.mxu0 0.0
        %v930 = vand.u32 %v307, 4294901760
        %931 = vmatpush1.xpose.msra.mxu0 %v930
        %932 = vmatprep.subr.mxu0 0.0
        %v933 = vand.u32 %v304, 4294901760
        %934 = vmatpush1.xpose.msra.mxu0 %v933
        %935 = vmatprep.subr.mxu0 0.0
        %v936 = vand.u32 %v301, 4294901760
        %937 = vmatpush1.xpose.msra.mxu0 %v936
        %938 = vmatprep.subr.mxu0 0.0
        %v939 = vand.u32 %v298, 4294901760
        %940 = vmatpush1.xpose.msra.mxu0 %v939
        %941 = vmatprep.subr.mxu0 0.0
        %v942 = vand.u32 %v295, 4294901760
        %943 = vmatpush1.xpose.msra.mxu0 %v942
        %944 = vmatprep.subr.mxu0 0.0
        %945 = vmatpush2.xpose.msra.mxu0 0.0
        %946 = vmatprep.subr.mxu0 0.0
        %947 = vmatpush2.xpose.msra.mxu0 0.0
        %948 = vmatprep.subr.mxu0 0.0
        %949 = vmatpush2.xpose.msra.mxu0 0.0
        %950 = vmatprep.subr.mxu0 0.0
        %951 = vmatpush2.xpose.msra.mxu0 0.0
        %952 = vmatprep.subr.mxu0 0.0
        %953 = vmatpush2.xpose.msra.mxu0 0.0
        %954 = vmatprep.subr.mxu0 0.0
        %955 = vmatpush2.xpose.msra.mxu0 0.0
        %956 = vmatprep.subr.mxu0 0.0
        %957 = vmatpush2.xpose.msra.mxu0 0.0
        %958 = vmatprep.subr.mxu0 0.0
        %959 = vmatpush2.xpose.msra.mxu0 0.0
        %960 = vmatprep.subr.mxu0 0.0
        %961 = vmatpush2.xpose.msra.mxu0 0.0
        %962 = vmatprep.subr.mxu0 0.0
        %963 = vmatpush2.xpose.msra.mxu0 0.0
        %964 = vmatprep.subr.mxu0 0.0
        %965 = vmatpush2.xpose.msra.mxu0 0.0
        %966 = vmatprep.subr.mxu0 0.0
        %967 = vmatpush2.xpose.msra.mxu0 0.0
        %968 = vmatprep.subr.mxu0 0.0
        %969 = vmatpush2.xpose.msra.mxu0 0.0
        %970 = vmatprep.subr.mxu0 0.0
        %971 = vmatpush2.xpose.msra.mxu0 0.0
        %972 = vmatprep.subr.mxu0 0.0
        %973 = vmatpush2.xpose.msra.mxu0 0.0
        %974 = vmatprep.subr.mxu0 0.0
        %975 = vmatpush2.xpose.msra.mxu0 0.0
        %976 = vmatprep.mubr.f32.mxu0 0.0
        %v977 = vand.u32 %v292, 4294901760
        %978 = vmatmul.mubr.f32.gmra.mxu0 %v977
        %v979 = vpop.f32.mrf.mxu0
        %v980 = vadd.f32 %v893, %v979
        %v981 = vpop.f32.mrf.mxu0
        %982 = vdwg.mxu0
        %v983 = vld [vmem:[%s265] sm:$0xff]
        %v984 = vadd.f32 %v980, %v983
        %985 = vadd.xlane.f32.xlu0 %v984
        %v986 = vpop.xlane.xlu0 %985
        %v987 = vrcp.pop 128.0
        %v988 = vmul.f32 %v986, %v987
        %v989 = vsub.f32 %v984, %v988
        %v990 = vmul.f32 %v989, %v989
        %991 = vadd.xlane.f32.xlu0 %v990
        %v992 = vpop.xlane.xlu0 %991
        %v993 = vmul.f32 %v992, %v987
        %v994 = vadd.f32 %v993, 1e-05
        %v995 = vrsqrt.pop %v994
        %v996 = vmul.f32 %v989, %v995
        %v997 = vld [vmem:[%s5] sm:$0x1]
        %v999 = vlaneseq
        %v1000 = vshrl.u32 %v999, 7
        %v1001 = vsub.s32 0, %v1000
        %v1002 = vrot.slane %v997, %v1001
        %v1004 = vmul.f32 %v996, %v1002
        %v1005 = vld [vmem:[%s6] sm:$0x1]
        %v1007 = vlaneseq
        %v1008 = vshrl.u32 %v1007, 7
        %v1009 = vsub.s32 0, %v1008
        %v1010 = vrot.slane %v1005, %v1009
        %v1012 = vadd.f32 %v1004, %v1010
        %1013 = vst [vmem:[%s257] sm:$0xff] %v1012
        %s1014 = sand.u32 %s166, 1
        %s1015 = scalar_lea.sflag [#allocation5], %s1014
        %s1016 = sand.u32 %s166, 1
        %s1017 = smul.addr %s1016, 8
        %s1018 = scalar_lea.vmem [#allocation4], %s1017
        // Predicated region
        $region45: #{tpu_custom_call.1} parent=43 // pred_check
          %p1019 = pneg %p176
        $region46: #{tpu_custom_call.1} parent=43 // pred_check_branch
          %1021 = sbr.rel (%p1019) target = $region48
        $region47: #{tpu_custom_call.1} parent=43 // pred_region
          %s1023 = ssub.s32 128, 128
          %1024 = vsyncadd %s1015, %s1023
          %s1025 = smul.addr %s22, 128
          %s1026 = scalar_lea.hbm %s7, %s1025
          %s1028 = sshll.u32 %s1018, 4
          %s1029 = int_to_ptr.vmem [resolvable:$true] %s1028
          %1031 = dma.vmem_to_hbm [thread:$0]  %s1029, 128, %s1026, %s1015
        $region48: #{tpu_custom_call.1} parent=43 // pred_fallthru
          _
      $region44: #{tpu_custom_call.1} parent=5 // pred_fallthru
        _
      %p1032 = scmp.le.s32.totalorder 2, %s17
      // Predicated region
      $region49: #{tpu_custom_call.1} parent=5 // pred_check
        %p1033 = pneg %p1032
      $region50: #{tpu_custom_call.1} parent=5 // pred_check_branch
        %1035 = sbr.rel (%p1033) target = $region52
      $region51: #{tpu_custom_call.1} parent=5 // pred_region
        %s1036 = ssub.s32 %s17, 2
        // Predicated region
        $region53: #{tpu_custom_call.1} parent=51 // pred_check
          %p1037 = pneg %p182
        $region54: #{tpu_custom_call.1} parent=51 // pred_check_branch
          %1039 = sbr.rel (%p1037) target = $region56
        $region55: #{tpu_custom_call.1} parent=51 // pred_region
          %s1040 = sand.u32 %s167, 1
          %s1041 = scalar_lea.sflag [#allocation5], %s1040
          %s1042 = sand.u32 %s167, 1
          %s1043 = smul.addr %s1042, 8
          %s1044 = scalar_lea.vmem [#allocation4], %s1043
          %1045 = dma.done %s1041, 128
        $region56: #{tpu_custom_call.1} parent=51 // pred_fallthru
          _
      $region52: #{tpu_custom_call.1} parent=5 // pred_fallthru
        _
    $region6: #{tpu_custom_call.1} parent=1 // loop_footer
      %s21 = sadd.s32 1, %s17
    $region7: #{tpu_custom_call.1} parent=1 // loop_footer_branch
      %16 = sbr.rel target = $region3
    $region8: #{tpu_custom_call.1} parent=1 // loop_exit
      _
    %1046 = vsyncpa [#allocation5], 1
    %s1047 = scalar_lea.sflag [#allocation5], 1
    %1048 = vsyncpa %s1047, 1

</llo_original>
